<compile_context>
chip_gen: v5e
topology: v5e:2x2
jax: 0.10.0
libtpu: 0.0.40
codegen_flags: <defaults>
</compile_context>

<pallas_src>
import jax
import jax.numpy as jnp
from jax.experimental import pallas as pl
from jax.experimental.pallas import tpu as pltpu

_LANE_CANDIDATES = (512, 256, 128)      # lane-dense widths (multiples of 128)
_ROW_ALIGN = 32                         # covers f32(8)/bf16(16)/int8(32) sublane packing
_TARGET_TILE_BYTES = 4 * 1024 * 1024    # ~4 MiB tile: >=86% of HBM roofline, 4x buffered = 16 MiB
_TARGET_BLOCKS = 8                      # aim for >=8 grid steps so v7x can shard 2 TCs
_MIN_PALLAS_ELEMS = 256 * 1024          # below this, plain XLA add is strictly cheaper


def _add_one_kernel(x_ref, o_ref):
    # Elementwise hot path: out = in + 1 in the output's native dtype.
    o_ref[...] = x_ref[...] + jnp.asarray(1, dtype=o_ref.dtype)


def cmx_forward(x, *, min_pallas_elems=_MIN_PALLAS_ELEMS, donate_input=False):
    """Returns x + 1 with the same shape and dtype as x.

    donate_input=True adds input_output_aliases={0: 0}; only useful when the
    caller actually donates x at its jit boundary (removes the output alloc).
    """
    x = jnp.asarray(x)
    one = jnp.asarray(1, dtype=x.dtype)

    # Small inputs (incl. the module's 0-d scalar): skip Pallas entirely.
    if x.size <= min_pallas_elems:
        return x + one

    # Pick a lane-dense slab width that divides the element count exactly so
    # the reshape is a free bitcast (no jnp.pad pre-copy, no output slice).
    lane = next((l for l in _LANE_CANDIDATES if x.size % l == 0), None)
    if lane is None:
        # Ragged total size: XLA's fused add is at roofline; a Pallas path
        # would need pad+slice HBM copies (~3x traffic), so don't.
        return x + one

    rows = x.size // lane
    x2d = x.reshape(rows, lane)          # contiguous reshape -> bitcast, no copy

    # Dtype-aware tile rows: ~4 MiB per tile, aligned to sublane packing, and
    # small enough that mid-size slabs still produce a multi-block grid.
    itemsize = jnp.dtype(x.dtype).itemsize
    tm_cap = max(_ROW_ALIGN,
                 (_TARGET_TILE_BYTES // (lane * itemsize)) // _ROW_ALIGN * _ROW_ALIGN)
    tm = min(tm_cap,
             max(_ROW_ALIGN,
                 pl.cdiv(pl.cdiv(rows, _TARGET_BLOCKS), _ROW_ALIGN) * _ROW_ALIGN))
    if tm >= rows:
        tm = rows                        # single full-extent block (exempt from (8,128) rule)
    grid = (pl.cdiv(rows, tm),)          # ragged last block is masked by Pallas

    out2d = pl.pallas_call(
        _add_one_kernel,
        out_shape=jax.ShapeDtypeStruct(x2d.shape, x2d.dtype),
        grid=grid,
        in_specs=[pl.BlockSpec((tm, lane), lambda i: (i, 0))],
        out_specs=pl.BlockSpec((tm, lane), lambda i: (i, 0)),
        input_output_aliases={0: 0} if donate_input else {},
        compiler_params=pltpu.CompilerParams(
            dimension_semantics=("parallel",),
            # 4x ~4 MiB buffers + bookkeeping; 32 MiB fits every generation
            # (v5e/v6e 128 MiB physical, v7x 64 MiB/TC) and lifts v5e's
            # 16 MiB scoped default so tiles don't shrink.
            vmem_limit_bytes=32 * 1024 * 1024,
        ),
    )(x2d)

    return out2d.reshape(x.shape)


if __name__ == "__main__":
    key = jax.random.PRNGKey(0)
    k1, k2, k3, k4 = jax.random.split(key, 4)

    # 1) The reference module is called with x = torch.tensor(1.0) -> 0-d scalar
    #    (bypass path: plain XLA add).
    x_scalar = jnp.asarray(1.0, dtype=jnp.float32)
    y_scalar = cmx_forward(x_scalar)
    jax.block_until_ready(y_scalar)
    assert y_scalar.shape == x_scalar.shape and y_scalar.dtype == x_scalar.dtype
    assert jnp.allclose(y_scalar, x_scalar + 1.0)

    # 2) Small batched f32 input, Pallas path forced (min_pallas_elems=0) so the
    #    kernel is exercised at a genuinely small shape.
    xb = jax.random.normal(k1, (2, 4, 16, 16), dtype=jnp.float32)   # 2048 elems
    yb = cmx_forward(xb, min_pallas_elems=0)
    jax.block_until_ready(yb)
    assert yb.shape == xb.shape and yb.dtype == xb.dtype
    assert jnp.allclose(yb, xb + 1.0)

    # 3) Above the default threshold: multi-block grid (rows=768, 8 blocks),
    #    no pad/slice (393216 % 512 == 0).
    xm = jax.random.normal(k2, (2, 4, 256, 192), dtype=jnp.float32)  # 393216 elems
    ym = cmx_forward(xm)
    jax.block_until_ready(ym)
    assert ym.shape == xm.shape and ym.dtype == xm.dtype
    assert jnp.allclose(ym, xm + 1.0)

    # 4) Ragged total size (not a multiple of 128) -> clean XLA fallback,
    #    no pad/slice HBM round-trips.
    xr = jax.random.normal(k3, (1200, 300), dtype=jnp.float32)
    yr = cmx_forward(xr)
    jax.block_until_ready(yr)
    assert yr.shape == xr.shape and yr.dtype == xr.dtype
    assert jnp.allclose(yr, xr + 1.0)

    # 5) bf16 input through the Pallas path -> dtype preserved (half the bytes).
    xh = jax.random.normal(k4, (8, 512), dtype=jnp.bfloat16)
    yh = cmx_forward(xh, min_pallas_elems=0)
    jax.block_until_ready(yh)
    assert yh.shape == xh.shape and yh.dtype == jnp.bfloat16
    assert jnp.allclose(yh.astype(jnp.float32),
                        xh.astype(jnp.float32) + 1.0, atol=1e-2)

    print("KERNEL_OK")
</pallas_src>

<mosaic_0001>
module attributes {stable_mosaic.version = 11 : i64} {
  func.func @_add_one_kernel(%arg0: i32, %arg1: memref<4x512xf32, #tpu.memory_space<vmem>>, %arg2: memref<4x512xf32, #tpu.memory_space<vmem>>) attributes {dimension_semantics = [#tpu.dimension_semantics<parallel>], iteration_bounds = array<i64: 1>, scalar_prefetch = 0 : i64, scratch_operands = 0 : i64, tpu.core_type = #tpu.core_type<tc>, window_params = [{transform_indices = @transform_0, window_bounds = array<i64: 4, 512>}, {transform_indices = @transform_1, window_bounds = array<i64: 4, 512>}]} {
    %c0 = arith.constant 0 : index
    %c0_0 = arith.constant 0 : index
    %0 = vector.load %arg1[%c0, %c0_0] : memref<4x512xf32, #tpu.memory_space<vmem>>, vector<4x512xf32>
    %cst = arith.constant 1.000000e+00 : f32
    %1 = vector.broadcast %cst : f32 to vector<4x512xf32>
    %2 = arith.addf %0, %1 : vector<4x512xf32>
    %c0_1 = arith.constant 0 : index
    %c0_2 = arith.constant 0 : index
    %3 = vector.load %arg2[%c0_1, %c0_2] : memref<4x512xf32, #tpu.memory_space<vmem>>, vector<4x512xf32>
    tpu.vector_store %arg2[%c0_1, %c0_2], %2 {strides = array<i32>} : memref<4x512xf32, #tpu.memory_space<vmem>>, vector<4x512xf32>,
    return
  }
  func.func @transform_0(%arg0: i32) -> (i32, i32) {
    %c0_i32 = arith.constant 0 : i32
    %c0_i32_0 = arith.constant 0 : i32
    return %arg0, %c0_i32 : i32, i32
  }
  func.func @transform_1(%arg0: i32) -> (i32, i32) {
    %c0_i32 = arith.constant 0 : i32
    %c0_i32_0 = arith.constant 0 : i32
    return %arg0, %c0_i32 : i32, i32
  }
}

</mosaic_0001>

<llo_original>
// kernel: tpu_custom_call.1
$region0: #{tpu_custom_call.1}
  #allocation0 [shape = 'u32[]', space=smem, size = 0x4, offset = 0x4, fixed_abs, tag = 'smem constant byte address 0x4 - core index']
  #allocation1 [shape = 'u32[72,128]{1,0:T(1,128)}', space=vmem, size = 0x9000, scoped, tag = 'internal scratch']
  %s0 = inlined_call_operand.hbm [shape: f32[4,512], index: 0, kind: input, shape index: {}]
  %s1 = inlined_call_operand.hbm [shape: f32[4,512], index: 1, kind: output, shape index: {}]
  %s2 = sld [smem:[#allocation0]]
  $region18: #{tpu_custom_call.1} parent=0
    _
  %s4 = ssub.s32 1, %s2
  %s5 = scalar_select 0, %s4, %s2
  $region1: #{tpu_custom_call.1} parent=0
    #allocation2 [shape = 'u8[8192]{0}', space=vmem, size = 0x2000, scoped, tag = 'input window, operand 0, single buffered']
    #allocation3 [shape = 's32[1]{0}', space=sflag, size = 0x4, scoped, tag = 'scoped memory for tpu_custom_call.1']
    #allocation4 [shape = 's32[1]{0}', space=sflag, size = 0x4, scoped, tag = 'scoped memory for tpu_custom_call.1']
    #allocation5 [shape = 'u8[8192]{0}', space=vmem, size = 0x2000, scoped, tag = 'output window, operand 0, single buffered']
    %6 = vsyncpa [#allocation3], 0
    %7 = vsyncpa [#allocation4], 0
    // Predicated region
    $region2: #{tpu_custom_call.1} parent=1 // pred_check
      _
    $region3: #{tpu_custom_call.1} parent=1 // pred_check_branch
      %9 = sbr.rel (0) target = $region5
    $region4: #{tpu_custom_call.1} parent=1 // pred_region
      %11 = vsyncadd [#allocation3], 0
      %s13 = sshll.u32 %s0, 4
      %s14 = int_to_ptr.hbm [resolvable:$true] %s13
      %s15 = sshll.u32 [#allocation2], 4
      %s16 = int_to_ptr.vmem [resolvable:$true] %s15
      %18 = dma.hbm_to_vmem [thread:$0]  %s14, 256, %s16, [#allocation3]
    $region5: #{tpu_custom_call.1} parent=1 // pred_fallthru
      _
    // Predicated region
    $region6: #{tpu_custom_call.1} parent=1 // pred_check
      _
    $region7: #{tpu_custom_call.1} parent=1 // pred_check_branch
      %20 = sbr.rel (0) target = $region9
    $region8: #{tpu_custom_call.1} parent=1 // pred_region
      %22 = dma.done [#allocation3], 256
    $region9: #{tpu_custom_call.1} parent=1 // pred_fallthru
      _
    %v23 = vld [vmem:[#allocation2] sm:$0xff]
    %v24 = vld [vmem:[#allocation2 + $0x8] sm:$0xff]
    %v25 = vadd.f32 %v23, 1.0
    %v26 = vadd.f32 %v24, 1.0
    %27 = vst [vmem:[#allocation5] sm:$0xff] %v25
    %28 = vst [vmem:[#allocation5 + $0x8] sm:$0xff] %v26
    // Predicated region
    $region10: #{tpu_custom_call.1} parent=1 // pred_check
      _
    $region11: #{tpu_custom_call.1} parent=1 // pred_check_branch
      %30 = sbr.rel (0) target = $region13
    $region12: #{tpu_custom_call.1} parent=1 // pred_region
      %32 = vsyncadd [#allocation4], 0
      %s34 = sshll.u32 [#allocation5], 4
      %s35 = int_to_ptr.vmem [resolvable:$true] %s34
      %s36 = sshll.u32 %s1, 4
      %s37 = int_to_ptr.hbm [resolvable:$true] %s36
      %39 = dma.vmem_to_hbm [thread:$0]  %s35, 256, %s37, [#allocation4]
    $region13: #{tpu_custom_call.1} parent=1 // pred_fallthru
      _
    // Predicated region
    $region14: #{tpu_custom_call.1} parent=1 // pred_check
      _
    $region15: #{tpu_custom_call.1} parent=1 // pred_check_branch
      %41 = sbr.rel (0) target = $region17
    $region16: #{tpu_custom_call.1} parent=1 // pred_region
      %43 = dma.done [#allocation4], 256
    $region17: #{tpu_custom_call.1} parent=1 // pred_fallthru
      _
    %44 = vsyncpa [#allocation3], 1
    %45 = vsyncpa [#allocation4], 1

</llo_original>
